<compile_context>
chip_gen: v6e
topology: v6e:2x2x1
jax: 0.10.0
libtpu: 0.0.40
codegen_flags: <defaults>
</compile_context>

<pallas_src>
import jax
import jax.numpy as jnp
from jax.experimental import pallas as pl
from jax.experimental.pallas import tpu as pltpu

BN_EPS = 1e-5
IN_EPS = 1e-5


def _round_up(x, m):
    return ((x + m - 1) // m) * m


def _sc_net_kernel(x_ref,
                   w1_ref, b1_ref,      # BN already folded into these
                   w2_ref, b2_ref,
                   wh_ref, bh_ref,      # fused + lane-padded head weights
                   out_ref):            # (tm, 64 + head_pad) lane-dense slab
    x = x_ref[...]

    # --- encoder ---
    # Linear(input_size, 256) with eval-mode BatchNorm folded in, then ReLU.
    h = jnp.dot(x, w1_ref[...], preferred_element_type=jnp.float32) + b1_ref[...]
    h = jnp.maximum(h, 0.0)
    # Dropout(p=0.5) -> identity in eval mode.
    # Linear(256, 64)
    e = jnp.dot(h, w2_ref[...], preferred_element_type=jnp.float32) + b2_ref[...]
    # InstanceNorm1d(64): per-row normalization, biased variance, no affine.
    mu = jnp.mean(e, axis=-1, keepdims=True)
    var = jnp.mean((e - mu) * (e - mu), axis=-1, keepdims=True)
    emb = (e - mu) * jax.lax.rsqrt(var + IN_EPS)

    # --- heads: ReLU -> fused Linear(64, 3*num_of_class padded) ---
    r = jnp.maximum(emb, 0.0)
    heads = jnp.dot(r, wh_ref[...], preferred_element_type=jnp.float32) + bh_ref[...]

    # One full-width (lane-dense) store of the packed output slab.
    out_ref[...] = jnp.concatenate([emb, heads], axis=-1)


def init_params(key, input_size, num_of_class):
    """Deterministic synthetic parameters (PyTorch-style, weights pre-transposed)."""
    ks = jax.random.split(key, 12)

    def lin(kw, kb, fan_in, fan_out):
        bound = 1.0 / jnp.sqrt(jnp.float32(fan_in))
        w = jax.random.uniform(kw, (fan_in, fan_out), jnp.float32, -bound, bound)
        b = jax.random.uniform(kb, (1, fan_out), jnp.float32, -bound, bound)
        return w, b

    w1, b1 = lin(ks[0], ks[1], input_size, 256)
    w2, b2 = lin(ks[2], ks[3], 256, 64)
    wc, bc = lin(ks[4], ks[5], 64, num_of_class)
    wk, bk = lin(ks[6], ks[7], 64, num_of_class)
    we, be = lin(ks[8], ks[9], 64, num_of_class)

    # BatchNorm1d(256) parameters + running stats (nontrivial values).
    bn_gamma = 1.0 + 0.1 * jax.random.normal(ks[10], (1, 256), jnp.float32)
    bn_beta = 0.1 * jax.random.normal(ks[11], (1, 256), jnp.float32)
    bn_rmean = 0.05 * jax.random.normal(jax.random.fold_in(key, 100), (1, 256), jnp.float32)
    bn_rvar = jax.random.uniform(jax.random.fold_in(key, 101), (1, 256), jnp.float32, 0.5, 1.5)

    return dict(w1=w1, b1=b1, bn_gamma=bn_gamma, bn_beta=bn_beta,
                bn_rmean=bn_rmean, bn_rvar=bn_rvar,
                w2=w2, b2=b2, wc=wc, bc=bc, wk=wk, bk=bk, we=we, be=be)


def sc_net_forward(data, params, input_size, tile_rows=1024):
    x = data.astype(jnp.float32).reshape(-1, input_size)
    n = x.shape[0]
    num_of_class = params["wc"].shape[1]

    # --- wrapper-side constant folding / packing (eval-mode, exact math) ---
    # Fold BatchNorm1d into the first Linear: y = (x@w1 + b1 - rm)*s + beta
    # with s = gamma * rsqrt(rv + eps)  ==>  x@(w1*s) + ((b1 - rm)*s + beta).
    s = params["bn_gamma"] * jax.lax.rsqrt(params["bn_rvar"] + BN_EPS)        # (1,256)
    w1f = params["w1"] * s                                                    # (in,256)
    b1f = (params["b1"] - params["bn_rmean"]) * s + params["bn_beta"]         # (1,256)

    # Fuse the three heads into one weight, lane-padded so emb(64)+heads fills
    # a multiple of 128 lanes (one lane-dense output slab).
    out_w = _round_up(64 + 3 * num_of_class, 128)
    head_pad = out_w - 64
    wh = jnp.zeros((64, head_pad), jnp.float32)
    wh = (wh.at[:, 0 * num_of_class:1 * num_of_class].set(params["wc"])
            .at[:, 1 * num_of_class:2 * num_of_class].set(params["wk"])
            .at[:, 2 * num_of_class:3 * num_of_class].set(params["we"]))
    bh = jnp.zeros((1, head_pad), jnp.float32)
    bh = (bh.at[:, 0 * num_of_class:1 * num_of_class].set(params["bc"])
            .at[:, 1 * num_of_class:2 * num_of_class].set(params["bk"])
            .at[:, 2 * num_of_class:3 * num_of_class].set(params["be"]))

    # --- batch tiling: fixed row tile (multiple of 8), pad ragged tail ---
    tm = _round_up(min(tile_rows, _round_up(n, 8)), 8)
    n_pad = _round_up(n, tm)
    if n_pad != n:
        x = jnp.pad(x, ((0, n_pad - n), (0, 0)))
    grid = (n_pad // tm,)

    def row_spec(shape):
        return pl.BlockSpec(shape, lambda i: (i, 0))

    def const_spec(shape):
        # Constant block index: weights/biases DMA'd once, resident across tiles.
        return pl.BlockSpec(shape, lambda i: (0, 0))

    in_specs = [
        row_spec((tm, input_size)),             # x tile (streams over grid)
        const_spec((input_size, 256)), const_spec((1, 256)),   # w1', b1'
        const_spec((256, 64)), const_spec((1, 64)),            # w2, b2
        const_spec((64, head_pad)), const_spec((1, head_pad)),  # fused heads
    ]
    out_specs = row_spec((tm, out_w))
    out_shape = jax.ShapeDtypeStruct((n_pad, out_w), jnp.float32)

    fn = pl.pallas_call(
        _sc_net_kernel,
        out_shape=out_shape,
        grid_spec=pltpu.PrefetchScalarGridSpec(
            num_scalar_prefetch=0,
            grid=grid,
            in_specs=in_specs,
            out_specs=out_specs,
        ),
        compiler_params=pltpu.CompilerParams(
            dimension_semantics=("parallel",)),
    )

    slab = fn(x, w1f, b1f, params["w2"], params["b2"], wh, bh)

    # Split the lane-dense slab, drop padded rows / lanes.
    emb = slab[:n, :64]
    cell = slab[:n, 64 + 0 * num_of_class:64 + 1 * num_of_class]
    clus = slab[:n, 64 + 1 * num_of_class:64 + 2 * num_of_class]
    eqv = slab[:n, 64 + 2 * num_of_class:64 + 3 * num_of_class]
    return emb, cell, clus, eqv


def sc_net_reference(data, params, input_size):
    """Plain-JAX reference of the same (eval-mode) forward pass, unfused."""
    x = data.astype(jnp.float32).reshape(-1, input_size)
    h = x @ params["w1"] + params["b1"]
    h = (h - params["bn_rmean"]) / jnp.sqrt(params["bn_rvar"] + BN_EPS)
    h = h * params["bn_gamma"] + params["bn_beta"]
    h = jnp.maximum(h, 0.0)
    e = h @ params["w2"] + params["b2"]
    mu = jnp.mean(e, axis=-1, keepdims=True)
    var = jnp.mean((e - mu) ** 2, axis=-1, keepdims=True)
    emb = (e - mu) / jnp.sqrt(var + IN_EPS)
    r = jnp.maximum(emb, 0.0)
    return (emb,
            r @ params["wc"] + params["bc"],
            r @ params["wk"] + params["bk"],
            r @ params["we"] + params["be"])


if __name__ == "__main__":
    input_size = 32
    num_of_class = 4
    batch = 20          # not a multiple of the tile -> exercises row padding

    key = jax.random.PRNGKey(0)
    k_data, k_params = jax.random.split(key)
    data = jax.random.normal(k_data, (batch, input_size), jnp.float32)
    params = init_params(k_params, input_size, num_of_class)

    # tile_rows=8 -> tm=8, n_pad=24, grid=(3,): multi-step pipelined grid even
    # at this small test size.  Real workloads use the default tile (1024).
    outs = sc_net_forward(data, params, input_size, tile_rows=8)
    outs = jax.block_until_ready(outs)

    refs = sc_net_reference(data, params, input_size)
    for o, r in zip(outs, refs):
        assert o.shape == r.shape and o.dtype == jnp.float32
        assert jnp.allclose(o, r, rtol=1e-4, atol=1e-4), "mismatch vs reference"

    print("KERNEL_OK")
</pallas_src>

<mosaic_0001>
module attributes {stable_mosaic.version = 11 : i64} {
  func.func @_sc_net_kernel(%arg0: i32, %arg1: memref<8x32xf32, #tpu.memory_space<vmem>>, %arg2: memref<32x256xf32, #tpu.memory_space<vmem>>, %arg3: memref<1x256xf32, #tpu.memory_space<vmem>>, %arg4: memref<256x64xf32, #tpu.memory_space<vmem>>, %arg5: memref<1x64xf32, #tpu.memory_space<vmem>>, %arg6: memref<64x64xf32, #tpu.memory_space<vmem>>, %arg7: memref<1x64xf32, #tpu.memory_space<vmem>>, %arg8: memref<8x128xf32, #tpu.memory_space<vmem>>) attributes {dimension_semantics = [#tpu.dimension_semantics<parallel>], iteration_bounds = array<i64: 3>, scalar_prefetch = 0 : i64, scratch_operands = 0 : i64, tpu.core_type = #tpu.core_type<tc>, window_params = [{transform_indices = @transform_0, window_bounds = array<i64: 8, 32>}, {pipeline_mode = #tpu.pipeline_mode<synchronous>, transform_indices = @transform_1, window_bounds = array<i64: 32, 256>}, {pipeline_mode = #tpu.pipeline_mode<synchronous>, transform_indices = @transform_2, window_bounds = array<i64: 1, 256>}, {pipeline_mode = #tpu.pipeline_mode<synchronous>, transform_indices = @transform_3, window_bounds = array<i64: 256, 64>}, {pipeline_mode = #tpu.pipeline_mode<synchronous>, transform_indices = @transform_4, window_bounds = array<i64: 1, 64>}, {pipeline_mode = #tpu.pipeline_mode<synchronous>, transform_indices = @transform_5, window_bounds = array<i64: 64, 64>}, {pipeline_mode = #tpu.pipeline_mode<synchronous>, transform_indices = @transform_6, window_bounds = array<i64: 1, 64>}, {transform_indices = @transform_7, window_bounds = array<i64: 8, 128>}]} {
    %c0 = arith.constant 0 : index
    %c0_0 = arith.constant 0 : index
    %0 = vector.load %arg1[%c0, %c0_0] : memref<8x32xf32, #tpu.memory_space<vmem>>, vector<8x32xf32>
    %c0_1 = arith.constant 0 : index
    %c0_2 = arith.constant 0 : index
    %1 = vector.load %arg2[%c0_1, %c0_2] : memref<32x256xf32, #tpu.memory_space<vmem>>, vector<32x256xf32>
    %cst = arith.constant dense<0.000000e+00> : vector<8x256xf32>
    %2 = tpu.matmul %0, %1, %cst {dimension_numbers = #tpu.dot_dimension_numbers<[1], [0], [0], [1], [0, 0, 1, 1], [], []>} : vector<8x32xf32>, vector<32x256xf32>, vector<8x256xf32> -> vector<8x256xf32>
    %c0_3 = arith.constant 0 : index
    %c0_4 = arith.constant 0 : index
    %3 = vector.load %arg3[%c0_3, %c0_4] : memref<1x256xf32, #tpu.memory_space<vmem>>, vector<1x256xf32>
    %4 = vector.broadcast %3 : vector<1x256xf32> to vector<8x256xf32>
    %5 = arith.addf %2, %4 : vector<8x256xf32>
    %cst_5 = arith.constant 0.000000e+00 : f32
    %6 = vector.broadcast %cst_5 : f32 to vector<8x256xf32>
    %7 = arith.maximumf %5, %6 : vector<8x256xf32>
    %c0_6 = arith.constant 0 : index
    %c0_7 = arith.constant 0 : index
    %8 = vector.load %arg4[%c0_6, %c0_7] : memref<256x64xf32, #tpu.memory_space<vmem>>, vector<256x64xf32>
    %cst_8 = arith.constant dense<0.000000e+00> : vector<8x64xf32>
    %9 = tpu.matmul %7, %8, %cst_8 {dimension_numbers = #tpu.dot_dimension_numbers<[1], [0], [0], [1], [0, 0, 1, 1], [], []>} : vector<8x256xf32>, vector<256x64xf32>, vector<8x64xf32> -> vector<8x64xf32>
    %c0_9 = arith.constant 0 : index
    %c0_10 = arith.constant 0 : index
    %10 = vector.load %arg5[%c0_9, %c0_10] : memref<1x64xf32, #tpu.memory_space<vmem>>, vector<1x64xf32>
    %11 = vector.broadcast %10 : vector<1x64xf32> to vector<8x64xf32>
    %12 = arith.addf %9, %11 : vector<8x64xf32>
    %cst_11 = arith.constant dense<0.000000e+00> : vector<8xf32>
    %13 = vector.multi_reduction <add>, %12, %cst_11 [1] : vector<8x64xf32> to vector<8xf32>
    %14 = vector.shape_cast %13 : vector<8xf32> to vector<8x1xf32>
    %cst_12 = arith.constant 6.400000e+01 : f32
    %15 = vector.broadcast %cst_12 : f32 to vector<8x1xf32>
    %16 = arith.divf %14, %15 : vector<8x1xf32>
    %17 = vector.broadcast %16 : vector<8x1xf32> to vector<8x64xf32>
    %18 = arith.subf %12, %17 : vector<8x64xf32>
    %19 = vector.broadcast %16 : vector<8x1xf32> to vector<8x64xf32>
    %20 = arith.subf %12, %19 : vector<8x64xf32>
    %21 = arith.mulf %18, %20 : vector<8x64xf32>
    %cst_13 = arith.constant dense<0.000000e+00> : vector<8xf32>
    %22 = vector.multi_reduction <add>, %21, %cst_13 [1] : vector<8x64xf32> to vector<8xf32>
    %23 = vector.shape_cast %22 : vector<8xf32> to vector<8x1xf32>
    %cst_14 = arith.constant 6.400000e+01 : f32
    %24 = vector.broadcast %cst_14 : f32 to vector<8x1xf32>
    %25 = arith.divf %23, %24 : vector<8x1xf32>
    %26 = vector.broadcast %16 : vector<8x1xf32> to vector<8x64xf32>
    %27 = arith.subf %12, %26 : vector<8x64xf32>
    %cst_15 = arith.constant 9.99999974E-6 : f32
    %28 = vector.broadcast %cst_15 : f32 to vector<8x1xf32>
    %29 = arith.addf %25, %28 : vector<8x1xf32>
    %30 = math.rsqrt %29 : vector<8x1xf32>
    %31 = vector.broadcast %30 : vector<8x1xf32> to vector<8x64xf32>
    %32 = arith.mulf %27, %31 : vector<8x64xf32>
    %cst_16 = arith.constant 0.000000e+00 : f32
    %33 = vector.broadcast %cst_16 : f32 to vector<8x64xf32>
    %34 = arith.maximumf %32, %33 : vector<8x64xf32>
    %c0_17 = arith.constant 0 : index
    %c0_18 = arith.constant 0 : index
    %35 = vector.load %arg6[%c0_17, %c0_18] : memref<64x64xf32, #tpu.memory_space<vmem>>, vector<64x64xf32>
    %cst_19 = arith.constant dense<0.000000e+00> : vector<8x64xf32>
    %36 = tpu.matmul %34, %35, %cst_19 {dimension_numbers = #tpu.dot_dimension_numbers<[1], [0], [0], [1], [0, 0, 1, 1], [], []>} : vector<8x64xf32>, vector<64x64xf32>, vector<8x64xf32> -> vector<8x64xf32>
    %c0_20 = arith.constant 0 : index
    %c0_21 = arith.constant 0 : index
    %37 = vector.load %arg7[%c0_20, %c0_21] : memref<1x64xf32, #tpu.memory_space<vmem>>, vector<1x64xf32>
    %38 = vector.broadcast %37 : vector<1x64xf32> to vector<8x64xf32>
    %39 = arith.addf %36, %38 : vector<8x64xf32>
    %40 = tpu.concatenate %32, %39 in 1 : vector<8x64xf32>, vector<8x64xf32> -> vector<8x128xf32>
    %c0_22 = arith.constant 0 : index
    %c0_23 = arith.constant 0 : index
    %41 = vector.load %arg8[%c0_22, %c0_23] : memref<8x128xf32, #tpu.memory_space<vmem>>, vector<8x128xf32>
    tpu.vector_store %arg8[%c0_22, %c0_23], %40 {strides = array<i32>} : memref<8x128xf32, #tpu.memory_space<vmem>>, vector<8x128xf32>,
    return
  }
  func.func @transform_0(%arg0: i32) -> (i32, i32) {
    %c0_i32 = arith.constant 0 : i32
    %c0_i32_0 = arith.constant 0 : i32
    return %arg0, %c0_i32 : i32, i32
  }
  func.func @transform_1(%arg0: i32) -> (i32, i32) {
    %c0_i32 = arith.constant 0 : i32
    %c0_i32_0 = arith.constant 0 : i32
    %c0_i32_1 = arith.constant 0 : i32
    return %c0_i32, %c0_i32_0 : i32, i32
  }
  func.func @transform_2(%arg0: i32) -> (i32, i32) {
    %c0_i32 = arith.constant 0 : i32
    %c0_i32_0 = arith.constant 0 : i32
    %c0_i32_1 = arith.constant 0 : i32
    return %c0_i32, %c0_i32_0 : i32, i32
  }
  func.func @transform_3(%arg0: i32) -> (i32, i32) {
    %c0_i32 = arith.constant 0 : i32
    %c0_i32_0 = arith.constant 0 : i32
    %c0_i32_1 = arith.constant 0 : i32
    return %c0_i32, %c0_i32_0 : i32, i32
  }
  func.func @transform_4(%arg0: i32) -> (i32, i32) {
    %c0_i32 = arith.constant 0 : i32
    %c0_i32_0 = arith.constant 0 : i32
    %c0_i32_1 = arith.constant 0 : i32
    return %c0_i32, %c0_i32_0 : i32, i32
  }
  func.func @transform_5(%arg0: i32) -> (i32, i32) {
    %c0_i32 = arith.constant 0 : i32
    %c0_i32_0 = arith.constant 0 : i32
    %c0_i32_1 = arith.constant 0 : i32
    return %c0_i32, %c0_i32_0 : i32, i32
  }
  func.func @transform_6(%arg0: i32) -> (i32, i32) {
    %c0_i32 = arith.constant 0 : i32
    %c0_i32_0 = arith.constant 0 : i32
    %c0_i32_1 = arith.constant 0 : i32
    return %c0_i32, %c0_i32_0 : i32, i32
  }
  func.func @transform_7(%arg0: i32) -> (i32, i32) {
    %c0_i32 = arith.constant 0 : i32
    %c0_i32_0 = arith.constant 0 : i32
    return %arg0, %c0_i32 : i32, i32
  }
}

</mosaic_0001>

<llo_original>
// kernel: tpu_custom_call.1
$region0: #{tpu_custom_call.1}
  #allocation0 [shape = 'u32[]', space=smem, size = 0x4, offset = 0x4, fixed_abs, tag = 'smem constant byte address 0x4 - core index']
  #allocation1 [shape = 'u32[144,128]{1,0:T(1,128)}', space=vmem, size = 0x12000, scoped, tag = 'internal scratch']
  %s0 = inlined_call_operand.vmem [shape: f32[24,32], index: 0, kind: input, shape index: {}]
  %s1 = inlined_call_operand.vmem [shape: f32[32,256], index: 1, kind: input, shape index: {}]
  %s2 = inlined_call_operand.vmem [shape: f32[1,256], index: 2, kind: input, shape index: {}]
  %s3 = inlined_call_operand.vmem [shape: f32[256,64], index: 3, kind: input, shape index: {}]
  %s4 = inlined_call_operand.vmem [shape: f32[1,64], index: 4, kind: input, shape index: {}]
  %s5 = inlined_call_operand.vmem [shape: f32[64,64], index: 5, kind: input, shape index: {}]
  %s6 = inlined_call_operand.vmem [shape: f32[1,64], index: 6, kind: input, shape index: {}]
  %s7 = inlined_call_operand.hbm [shape: f32[24,128], index: 7, kind: output, shape index: {}]
  %s8 = sld [smem:[#allocation0]]
  $region61: #{tpu_custom_call.1} parent=0
    _
  %s10 = ssub.s32 1, %s8
  %s11 = scalar_select 0, %s10, %s8
  $region1: #{tpu_custom_call.1} parent=0
    #allocation2 [shape = 'u8[8192]{0}', space=vmem, size = 0x2000, scoped, tag = 'output window, operand 0']
    #allocation3 [shape = 's32[2]{0}', space=sflag, size = 0x8, scoped, tag = 'scoped memory for tpu_custom_call.1']
    %12 = vsyncpa [#allocation3], 0
    %s13 = scalar_lea.sflag [#allocation3], 1
    %14 = vsyncpa %s13, 0
    loop: start=0, step=1, limit=5
    $region2: #{tpu_custom_call.1} parent=1 // loop_pre_header
      _
    $region3: #{tpu_custom_call.1} parent=1 // loop_header
      %s16 = sphi 0, %s20
      %p17 = scmp.ge.s32.totalorder %s16, 5
      %s26 = sphi 0, %s28
      %s29 = sphi 0, %s26
      %s30 = sphi 0, %s29
      %s46 = sphi 0, %s30
      %s50 = sphi 0, %s50
      %s52 = sphi 0, %s50
      %s53 = sphi 0, %s52
      %s67 = sphi 0, %s53
      %s71 = sphi 0, %s71
      %s73 = sphi 0, %s71
      %s74 = sphi 0, %s73
      %s88 = sphi 0, %s74
      %s92 = sphi 0, %s92
      %s94 = sphi 0, %s92
      %s95 = sphi 0, %s94
      %s109 = sphi 0, %s95
      %s113 = sphi 0, %s113
      %s115 = sphi 0, %s113
      %s116 = sphi 0, %s115
      %s130 = sphi 0, %s116
      %s134 = sphi 0, %s134
      %s136 = sphi 0, %s134
      %s137 = sphi 0, %s136
      %s151 = sphi 0, %s137
      %s155 = sphi 0, %s155
      %s157 = sphi 0, %s155
      %s158 = sphi 0, %s157
      %s172 = sphi 0, %s158
      %s178 = sphi 0, %s180
      %s181 = sphi 0, %s178
      %s182 = sphi 0, %s181
      %s198 = sphi 0, %s182
    $region4: #{tpu_custom_call.1} parent=1 // loop_header_branch
      %19 = sbr.rel (%p17) target = $region8
    $region5: #{tpu_custom_call.1} parent=1 // loop_body
      %s21 = ssub.s32 %s16, 1
      %s22 = ssub.s32 %s16, 2
      %s23 = sadd.s32 %s16, 1
      %s24 = ssub.s32 %s16, %s23
      %p25 = scmp.eq.s32.totalorder %s24, 0
      %s27 = sadd.s32 %s26, 1
      %s28 = scalar_select %p25, %s26, %s27
      %p31 = pneg %p25
      %p32 = scmp.eq.s32.totalorder %s16, 2
      %p33 = por %p31, %p32
      %p34 = scmp.ne.s32.totalorder %s26, %s29
      %p35 = scmp.eq.s32.totalorder %s16, 0
      %p36 = por %p34, %p35
      %p37 = scmp.ne.s32.totalorder %s26, %s29
      %p38 = scmp.eq.s32.totalorder %s21, 2
      %p39 = por %p37, %p38
      %p40 = scmp.ne.s32.totalorder %s29, %s30
      %p41 = scmp.eq.s32.totalorder %s21, 0
      %p42 = por %p40, %p41
      %p43 = scmp.ne.s32.totalorder %s29, %s30
      %p44 = scmp.eq.s32.totalorder %s22, 2
      %p45 = por %p43, %p44
      %p47 = scmp.ne.s32.totalorder %s30, %s46
      %p48 = scmp.eq.s32.totalorder %s22, 0
      %p49 = por %p47, %p48
      %s51 = sadd.s32 %s50, 1
      %p54 = scmp.eq.s32.totalorder %s16, 2
      %p55 = scmp.ne.s32.totalorder %s50, %s52
      %p56 = scmp.eq.s32.totalorder %s16, 0
      %p57 = por %p55, %p56
      %p58 = scmp.ne.s32.totalorder %s50, %s52
      %p59 = scmp.eq.s32.totalorder %s21, 2
      %p60 = por %p58, %p59
      %p61 = scmp.ne.s32.totalorder %s52, %s53
      %p62 = scmp.eq.s32.totalorder %s21, 0
      %p63 = por %p61, %p62
      %p64 = scmp.ne.s32.totalorder %s52, %s53
      %p65 = scmp.eq.s32.totalorder %s22, 2
      %p66 = por %p64, %p65
      %p68 = scmp.ne.s32.totalorder %s53, %s67
      %p69 = scmp.eq.s32.totalorder %s22, 0
      %p70 = por %p68, %p69
      %s72 = sadd.s32 %s71, 1
      %p75 = scmp.eq.s32.totalorder %s16, 2
      %p76 = scmp.ne.s32.totalorder %s71, %s73
      %p77 = scmp.eq.s32.totalorder %s16, 0
      %p78 = por %p76, %p77
      %p79 = scmp.ne.s32.totalorder %s71, %s73
      %p80 = scmp.eq.s32.totalorder %s21, 2
      %p81 = por %p79, %p80
      %p82 = scmp.ne.s32.totalorder %s73, %s74
      %p83 = scmp.eq.s32.totalorder %s21, 0
      %p84 = por %p82, %p83
      %p85 = scmp.ne.s32.totalorder %s73, %s74
      %p86 = scmp.eq.s32.totalorder %s22, 2
      %p87 = por %p85, %p86
      %p89 = scmp.ne.s32.totalorder %s74, %s88
      %p90 = scmp.eq.s32.totalorder %s22, 0
      %p91 = por %p89, %p90
      %s93 = sadd.s32 %s92, 1
      %p96 = scmp.eq.s32.totalorder %s16, 2
      %p97 = scmp.ne.s32.totalorder %s92, %s94
      %p98 = scmp.eq.s32.totalorder %s16, 0
      %p99 = por %p97, %p98
      %p100 = scmp.ne.s32.totalorder %s92, %s94
      %p101 = scmp.eq.s32.totalorder %s21, 2
      %p102 = por %p100, %p101
      %p103 = scmp.ne.s32.totalorder %s94, %s95
      %p104 = scmp.eq.s32.totalorder %s21, 0
      %p105 = por %p103, %p104
      %p106 = scmp.ne.s32.totalorder %s94, %s95
      %p107 = scmp.eq.s32.totalorder %s22, 2
      %p108 = por %p106, %p107
      %p110 = scmp.ne.s32.totalorder %s95, %s109
      %p111 = scmp.eq.s32.totalorder %s22, 0
      %p112 = por %p110, %p111
      %s114 = sadd.s32 %s113, 1
      %p117 = scmp.eq.s32.totalorder %s16, 2
      %p118 = scmp.ne.s32.totalorder %s113, %s115
      %p119 = scmp.eq.s32.totalorder %s16, 0
      %p120 = por %p118, %p119
      %p121 = scmp.ne.s32.totalorder %s113, %s115
      %p122 = scmp.eq.s32.totalorder %s21, 2
      %p123 = por %p121, %p122
      %p124 = scmp.ne.s32.totalorder %s115, %s116
      %p125 = scmp.eq.s32.totalorder %s21, 0
      %p126 = por %p124, %p125
      %p127 = scmp.ne.s32.totalorder %s115, %s116
      %p128 = scmp.eq.s32.totalorder %s22, 2
      %p129 = por %p127, %p128
      %p131 = scmp.ne.s32.totalorder %s116, %s130
      %p132 = scmp.eq.s32.totalorder %s22, 0
      %p133 = por %p131, %p132
      %s135 = sadd.s32 %s134, 1
      %p138 = scmp.eq.s32.totalorder %s16, 2
      %p139 = scmp.ne.s32.totalorder %s134, %s136
      %p140 = scmp.eq.s32.totalorder %s16, 0
      %p141 = por %p139, %p140
      %p142 = scmp.ne.s32.totalorder %s134, %s136
      %p143 = scmp.eq.s32.totalorder %s21, 2
      %p144 = por %p142, %p143
      %p145 = scmp.ne.s32.totalorder %s136, %s137
      %p146 = scmp.eq.s32.totalorder %s21, 0
      %p147 = por %p145, %p146
      %p148 = scmp.ne.s32.totalorder %s136, %s137
      %p149 = scmp.eq.s32.totalorder %s22, 2
      %p150 = por %p148, %p149
      %p152 = scmp.ne.s32.totalorder %s137, %s151
      %p153 = scmp.eq.s32.totalorder %s22, 0
      %p154 = por %p152, %p153
      %s156 = sadd.s32 %s155, 1
      %p159 = scmp.eq.s32.totalorder %s16, 2
      %p160 = scmp.ne.s32.totalorder %s155, %s157
      %p161 = scmp.eq.s32.totalorder %s16, 0
      %p162 = por %p160, %p161
      %p163 = scmp.ne.s32.totalorder %s155, %s157
      %p164 = scmp.eq.s32.totalorder %s21, 2
      %p165 = por %p163, %p164
      %p166 = scmp.ne.s32.totalorder %s157, %s158
      %p167 = scmp.eq.s32.totalorder %s21, 0
      %p168 = por %p166, %p167
      %p169 = scmp.ne.s32.totalorder %s157, %s158
      %p170 = scmp.eq.s32.totalorder %s22, 2
      %p171 = por %p169, %p170
      %p173 = scmp.ne.s32.totalorder %s158, %s172
      %p174 = scmp.eq.s32.totalorder %s22, 0
      %p175 = por %p173, %p174
      %s176 = ssub.s32 %s16, %s23
      %p177 = scmp.eq.s32.totalorder %s176, 0
      %s179 = sadd.s32 %s178, 1
      %s180 = scalar_select %p177, %s178, %s179
      %p183 = pneg %p177
      %p184 = scmp.eq.s32.totalorder %s16, 2
      %p185 = por %p183, %p184
      %p186 = scmp.ne.s32.totalorder %s178, %s181
      %p187 = scmp.eq.s32.totalorder %s16, 0
      %p188 = por %p186, %p187
      %p189 = scmp.ne.s32.totalorder %s178, %s181
      %p190 = scmp.eq.s32.totalorder %s21, 2
      %p191 = por %p189, %p190
      %p192 = scmp.ne.s32.totalorder %s181, %s182
      %p193 = scmp.eq.s32.totalorder %s21, 0
      %p194 = por %p192, %p193
      %p195 = scmp.ne.s32.totalorder %s181, %s182
      %p196 = scmp.eq.s32.totalorder %s22, 2
      %p197 = por %p195, %p196
      %p199 = scmp.ne.s32.totalorder %s182, %s198
      %p200 = scmp.eq.s32.totalorder %s22, 0
      %p201 = por %p199, %p200
      %p202 = scmp.le.s32.totalorder 1, %s16
      %p203 = scmp.lt.s32.totalorder %s16, 4
      %p204 = pnand %p202, %p203
      %p205 = pneg %p204
      // Predicated region
      $region9: #{tpu_custom_call.1} parent=5 // pred_check
        _
      $region10: #{tpu_custom_call.1} parent=5 // pred_check_branch
        %207 = sbr.rel (%p204) target = $region12
      $region11: #{tpu_custom_call.1} parent=5 // pred_region
        %s208 = ssub.s32 %s16, 1
        // Predicated region
        $region13: #{tpu_custom_call.1} parent=11 // pred_check
          %p209 = pneg %p63
        $region14: #{tpu_custom_call.1} parent=11 // pred_check_branch
          %211 = sbr.rel (%p209) target = $region16
        $region15: #{tpu_custom_call.1} parent=11 // pred_region
          _
        $region16: #{tpu_custom_call.1} parent=11 // pred_fallthru
          _
        // Predicated region
        $region17: #{tpu_custom_call.1} parent=11 // pred_check
          %p212 = pneg %p84
        $region18: #{tpu_custom_call.1} parent=11 // pred_check_branch
          %214 = sbr.rel (%p212) target = $region20
        $region19: #{tpu_custom_call.1} parent=11 // pred_region
          _
        $region20: #{tpu_custom_call.1} parent=11 // pred_fallthru
          _
        // Predicated region
        $region21: #{tpu_custom_call.1} parent=11 // pred_check
          %p215 = pneg %p105
        $region22: #{tpu_custom_call.1} parent=11 // pred_check_branch
          %217 = sbr.rel (%p215) target = $region24
        $region23: #{tpu_custom_call.1} parent=11 // pred_region
          _
        $region24: #{tpu_custom_call.1} parent=11 // pred_fallthru
          _
        // Predicated region
        $region25: #{tpu_custom_call.1} parent=11 // pred_check
          %p218 = pneg %p126
        $region26: #{tpu_custom_call.1} parent=11 // pred_check_branch
          %220 = sbr.rel (%p218) target = $region28
        $region27: #{tpu_custom_call.1} parent=11 // pred_region
          _
        $region28: #{tpu_custom_call.1} parent=11 // pred_fallthru
          _
        // Predicated region
        $region29: #{tpu_custom_call.1} parent=11 // pred_check
          %p221 = pneg %p147
        $region30: #{tpu_custom_call.1} parent=11 // pred_check_branch
          %223 = sbr.rel (%p221) target = $region32
        $region31: #{tpu_custom_call.1} parent=11 // pred_region
          _
        $region32: #{tpu_custom_call.1} parent=11 // pred_fallthru
          _
        // Predicated region
        $region33: #{tpu_custom_call.1} parent=11 // pred_check
          %p224 = pneg %p168
        $region34: #{tpu_custom_call.1} parent=11 // pred_check_branch
          %226 = sbr.rel (%p224) target = $region36
        $region35: #{tpu_custom_call.1} parent=11 // pred_region
          _
        $region36: #{tpu_custom_call.1} parent=11 // pred_fallthru
          _
      $region12: #{tpu_custom_call.1} parent=5 // pred_fallthru
        _
      %p227 = scmp.lt.s32.totalorder %s16, 3
      // Predicated region
      $region37: #{tpu_custom_call.1} parent=5 // pred_check
        %p228 = pneg %p227
      $region38: #{tpu_custom_call.1} parent=5 // pred_check_branch
        %230 = sbr.rel (%p228) target = $region40
      $region39: #{tpu_custom_call.1} parent=5 // pred_region
        // Predicated region
        $region41: #{tpu_custom_call.1} parent=39 // pred_check
          %p231 = pneg %p36
        $region42: #{tpu_custom_call.1} parent=39 // pred_check_branch
          %233 = sbr.rel (%p231) target = $region44
        $region43: #{tpu_custom_call.1} parent=39 // pred_region
          %p234 = scmp.lt.s32.totalorder %s16, 2
          %s235 = scalar_select %p234, %s16, 2
          %s236 = smul.addr %s235, 8
          %s237 = scalar_lea.vmem %s0, %s236
        $region44: #{tpu_custom_call.1} parent=39 // pred_fallthru
          _
      $region40: #{tpu_custom_call.1} parent=5 // pred_fallthru
        _
      %p238 = scmp.le.s32.totalorder 1, %s16
      %p239 = scmp.lt.s32.totalorder %s16, 4
      %p240 = pnand %p238, %p239
      %p241 = pneg %p240
      // Predicated region
      $region45: #{tpu_custom_call.1} parent=5 // pred_check
        _
      $region46: #{tpu_custom_call.1} parent=5 // pred_check_branch
        %243 = sbr.rel (%p240) target = $region48
      $region47: #{tpu_custom_call.1} parent=5 // pred_region
        %s244 = ssub.s32 %s16, 1
        %p245 = scmp.lt.s32.totalorder %s21, 2
        %s246 = scalar_select %p245, %s21, 2
        %s247 = smul.addr %s246, 8
        %s248 = scalar_lea.vmem %s0, %s247
        %p249 = pneg %p42
        %p250 = pneg %p39
        %p251 = pneg %p63
        %p252 = pneg %p60
        %p253 = pneg %p84
        %p254 = pneg %p81
        %p255 = pneg %p105
        %p256 = pneg %p102
        %p257 = pneg %p126
        %p258 = pneg %p123
        %p259 = pneg %p147
        %p260 = pneg %p144
        %p261 = pneg %p168
        %p262 = pneg %p165
        %p263 = pneg %p194
        %p264 = pneg %p191
        %s265 = sand.u32 %s181, 1
        %s266 = scalar_lea.sflag [#allocation3], %s265
        %s267 = sand.u32 %s181, 1
        %s268 = smul.addr %s267, 8
        %s269 = scalar_lea.vmem [#allocation2], %s268
        %p270 = scmp.lt.s32.totalorder %s21, 2
        %s271 = scalar_select %p270, %s21, 2
        %s272 = smul.addr %s271, 8
        %s273 = scalar_lea.vmem %s0, %s272
        %v274 = vld [vmem:[%s273] sm:$0xff]
        %v275 = vld [vmem:[%s1] sm:$0xff]
        %v276 = vld [vmem:[%s1 + $0x8] sm:$0xff]
        %v277 = vld [vmem:[%s1 + $0x10] sm:$0xff]
        %v278 = vld [vmem:[%s1 + $0x18] sm:$0xff]
        %v279 = vld [vmem:[%s1 + $0x20] sm:$0xff]
        %v280 = vld [vmem:[%s1 + $0x28] sm:$0xff]
        %v281 = vld [vmem:[%s1 + $0x30] sm:$0xff]
        %v282 = vld [vmem:[%s1 + $0x38] sm:$0xff]
        %v283 = vld [vmem:[%s2] sm:$0x3]
        %v285 = vlaneseq
        %v286 = vshrl.u32 %v285, 7
        %v287 = vsub.s32 0, %v286
        %v288 = vrot.slane %v283, %v287
        %v289 = vlaneseq
        %v290 = vshrl.u32 %v289, 7
        %v291 = vsub.s32 1, %v290
        %v292 = vrot.slane %v283, %v291
        %vm295 = vcmask 261120
        %v297 = vsel %vm295, %v274, 0
        %299 = vmatprep.subr.mxu0 0.0
        %300 = vmatpush1.msra.mxu0 0.0
        %301 = vmatprep.subr.mxu0 0.0
        %302 = vmatpush1.msra.mxu0 0.0
        %303 = vmatprep.subr.mxu0 0.0
        %304 = vmatpush1.msra.mxu0 0.0
        %305 = vmatprep.subr.mxu0 0.0
        %306 = vmatpush1.msra.mxu0 0.0
        %307 = vmatprep.subr.mxu0 0.0
        %308 = vmatpush1.msra.mxu0 0.0
        %309 = vmatprep.subr.mxu0 0.0
        %310 = vmatpush1.msra.mxu0 0.0
        %311 = vmatprep.subr.mxu0 0.0
        %312 = vmatpush1.msra.mxu0 0.0
        %313 = vmatprep.subr.mxu0 0.0
        %314 = vmatpush1.msra.mxu0 0.0
        %315 = vmatprep.subr.mxu0 0.0
        %316 = vmatpush1.msra.mxu0 0.0
        %317 = vmatprep.subr.mxu0 0.0
        %318 = vmatpush1.msra.mxu0 0.0
        %319 = vmatprep.subr.mxu0 0.0
        %320 = vmatpush1.msra.mxu0 0.0
        %321 = vmatprep.subr.mxu0 0.0
        %322 = vmatpush1.msra.mxu0 0.0
        %323 = vmatprep.subr.mxu0 %v282
        %324 = vmatpush1.msra.mxu0 %v281
        %325 = vmatprep.subr.mxu0 %v280
        %326 = vmatpush1.msra.mxu0 %v279
        %327 = vmatprep.subr.mxu0 %v278
        %328 = vmatpush1.msra.mxu0 %v277
        %329 = vmatprep.subr.mxu0 %v276
        %330 = vmatpush1.msra.mxu0 %v275
        %331 = vmatprep.subr.mxu0 0.0
        %332 = vmatpush2.msra.mxu0 0.0
        %333 = vmatprep.subr.mxu0 0.0
        %334 = vmatpush2.msra.mxu0 0.0
        %335 = vmatprep.subr.mxu0 0.0
        %336 = vmatpush2.msra.mxu0 0.0
        %337 = vmatprep.subr.mxu0 0.0
        %338 = vmatpush2.msra.mxu0 0.0
        %339 = vmatprep.subr.mxu0 0.0
        %340 = vmatpush2.msra.mxu0 0.0
        %341 = vmatprep.subr.mxu0 0.0
        %342 = vmatpush2.msra.mxu0 0.0
        %343 = vmatprep.subr.mxu0 0.0
        %344 = vmatpush2.msra.mxu0 0.0
        %345 = vmatprep.subr.mxu0 0.0
        %346 = vmatpush2.msra.mxu0 0.0
        %347 = vmatprep.subr.mxu0 0.0
        %348 = vmatpush2.msra.mxu0 0.0
        %349 = vmatprep.subr.mxu0 0.0
        %350 = vmatpush2.msra.mxu0 0.0
        %351 = vmatprep.subr.mxu0 0.0
        %352 = vmatpush2.msra.mxu0 0.0
        %353 = vmatprep.subr.mxu0 0.0
        %354 = vmatpush2.msra.mxu0 0.0
        %355 = vmatprep.subr.mxu0 0.0
        %356 = vmatpush2.msra.mxu0 0.0
        %357 = vmatprep.subr.mxu0 0.0
        %358 = vmatpush2.msra.mxu0 0.0
        %359 = vmatprep.subr.mxu0 0.0
        %360 = vmatpush2.msra.mxu0 0.0
        %361 = vmatprep.subr.mxu0 0.0
        %362 = vmatpush2.msra.mxu0 0.0
        %363 = vmatprep.mubr.f32.mxu0 0.0
        %364 = vmatmul.mubr.f32.gmra.mxu0 %v297
        %v365 = vpop.f32.mrf.mxu0
        %v366 = vadd.f32 %v288, %v365
        %v367 = vpop.f32.mrf.mxu0
        %v368 = vadd.f32 %v292, %v367
        %369 = vdwg.mxu0
        %v370 = vmax.f32 %v366, 0.0
        %v371 = vmax.f32 %v368, 0.0
        %v372 = vld [vmem:[%s3] sm:$0xff]
        %v373 = vld [vmem:[%s3 + $0x8] sm:$0xff]
        %v374 = vld [vmem:[%s3 + $0x10] sm:$0xff]
        %v375 = vld [vmem:[%s3 + $0x18] sm:$0xff]
        %v376 = vld [vmem:[%s3 + $0x20] sm:$0xff]
        %v377 = vld [vmem:[%s3 + $0x28] sm:$0xff]
        %v378 = vld [vmem:[%s3 + $0x30] sm:$0xff]
        %v379 = vld [vmem:[%s3 + $0x38] sm:$0xff]
        %v380 = vld [vmem:[%s3 + $0x40] sm:$0xff]
        %v381 = vld [vmem:[%s3 + $0x48] sm:$0xff]
        %v382 = vld [vmem:[%s3 + $0x50] sm:$0xff]
        %v383 = vld [vmem:[%s3 + $0x58] sm:$0xff]
        %v384 = vld [vmem:[%s3 + $0x60] sm:$0xff]
        %v385 = vld [vmem:[%s3 + $0x68] sm:$0xff]
        %v386 = vld [vmem:[%s3 + $0x70] sm:$0xff]
        %v387 = vld [vmem:[%s3 + $0x78] sm:$0xff]
        %v388 = vld [vmem:[%s3 + $0x80] sm:$0xff]
        %v389 = vld [vmem:[%s3 + $0x88] sm:$0xff]
        %v390 = vld [vmem:[%s3 + $0x90] sm:$0xff]
        %v391 = vld [vmem:[%s3 + $0x98] sm:$0xff]
        %v392 = vld [vmem:[%s3 + $0xa0] sm:$0xff]
        %v393 = vld [vmem:[%s3 + $0xa8] sm:$0xff]
        %v394 = vld [vmem:[%s3 + $0xb0] sm:$0xff]
        %v395 = vld [vmem:[%s3 + $0xb8] sm:$0xff]
        %v396 = vld [vmem:[%s3 + $0xc0] sm:$0xff]
        %v397 = vld [vmem:[%s3 + $0xc8] sm:$0xff]
        %v398 = vld [vmem:[%s3 + $0xd0] sm:$0xff]
        %v399 = vld [vmem:[%s3 + $0xd8] sm:$0xff]
        %v400 = vld [vmem:[%s3 + $0xe0] sm:$0xff]
        %v401 = vld [vmem:[%s3 + $0xe8] sm:$0xff]
        %v402 = vld [vmem:[%s3 + $0xf0] sm:$0xff]
        %v403 = vld [vmem:[%s3 + $0xf8] sm:$0xff]
        %v404 = vld [vmem:[%s4] sm:$0x1]
        %v406 = vlaneseq
        %v407 = vshrl.u32 %v406, 7
        %v408 = vsub.s32 0, %v407
        %v409 = vrot.slane %v404, %v408
        %411 = vmatprep.subr.mxu0 0.0
        %412 = vmatpush1.msra.mxu0 %v387
        %413 = vmatprep.subr.mxu0 0.0
        %414 = vmatpush1.msra.mxu0 %v386
        %415 = vmatprep.subr.mxu0 0.0
        %416 = vmatpush1.msra.mxu0 %v385
        %417 = vmatprep.subr.mxu0 0.0
        %418 = vmatpush1.msra.mxu0 %v384
        %419 = vmatprep.subr.mxu0 0.0
        %420 = vmatpush1.msra.mxu0 %v383
        %421 = vmatprep.subr.mxu0 0.0
        %422 = vmatpush1.msra.mxu0 %v382
        %423 = vmatprep.subr.mxu0 0.0
        %424 = vmatpush1.msra.mxu0 %v381
        %425 = vmatprep.subr.mxu0 0.0
        %426 = vmatpush1.msra.mxu0 %v380
        %427 = vmatprep.subr.mxu0 0.0
        %428 = vmatpush1.msra.mxu0 %v379
        %429 = vmatprep.subr.mxu0 0.0
        %430 = vmatpush1.msra.mxu0 %v378
        %431 = vmatprep.subr.mxu0 0.0
        %432 = vmatpush1.msra.mxu0 %v377
        %433 = vmatprep.subr.mxu0 0.0
        %434 = vmatpush1.msra.mxu0 %v376
        %435 = vmatprep.subr.mxu0 0.0
        %436 = vmatpush1.msra.mxu0 %v375
        %437 = vmatprep.subr.mxu0 0.0
        %438 = vmatpush1.msra.mxu0 %v374
        %439 = vmatprep.subr.mxu0 0.0
        %440 = vmatpush1.msra.mxu0 %v373
        %441 = vmatprep.subr.mxu0 0.0
        %442 = vmatpush1.msra.mxu0 %v372
        %443 = vmatprep.subr.mxu0 0.0
        %444 = vmatpush2.msra.mxu0 %v403
        %445 = vmatprep.subr.mxu0 0.0
        %446 = vmatpush2.msra.mxu0 %v402
        %447 = vmatprep.subr.mxu0 0.0
        %448 = vmatpush2.msra.mxu0 %v401
        %449 = vmatprep.subr.mxu0 0.0
        %450 = vmatpush2.msra.mxu0 %v400
        %451 = vmatprep.subr.mxu0 0.0
        %452 = vmatpush2.msra.mxu0 %v399
        %453 = vmatprep.subr.mxu0 0.0
        %454 = vmatpush2.msra.mxu0 %v398
        %455 = vmatprep.subr.mxu0 0.0
        %456 = vmatpush2.msra.mxu0 %v397
        %457 = vmatprep.subr.mxu0 0.0
        %458 = vmatpush2.msra.mxu0 %v396
        %459 = vmatprep.subr.mxu0 0.0
        %460 = vmatpush2.msra.mxu0 %v395
        %461 = vmatprep.subr.mxu0 0.0
        %462 = vmatpush2.msra.mxu0 %v394
        %463 = vmatprep.subr.mxu0 0.0
        %464 = vmatpush2.msra.mxu0 %v393
        %465 = vmatprep.subr.mxu0 0.0
        %466 = vmatpush2.msra.mxu0 %v392
        %467 = vmatprep.subr.mxu0 0.0
        %468 = vmatpush2.msra.mxu0 %v391
        %469 = vmatprep.subr.mxu0 0.0
        %470 = vmatpush2.msra.mxu0 %v390
        %471 = vmatprep.subr.mxu0 0.0
        %472 = vmatpush2.msra.mxu0 %v389
        %473 = vmatprep.subr.mxu0 0.0
        %474 = vmatpush2.msra.mxu0 %v388
        %475 = vmatprep.mubr.f32.mxu0 %v371
        %476 = vmatmul.mubr.f32.gmra.mxu0 %v370
        %v477 = vpop.f32.mrf.mxu0
        %v478 = vadd.f32 %v409, %v477
        %v479 = vpop.f32.mrf.mxu0
        %480 = vdwg.mxu0
        %vm481 = vcmask 523264
        %v482 = vsel %vm481, %v478, 0.0
        %483 = vadd.xlane.f32.xlu0 %v482
        %v484 = vpop.xlane.xlu0 %483
        %v485 = vrcp.pop 64.0
        %v486 = vmul.f32 %v484, %v485
        %v487 = vsub.f32 %v478, %v486
        %v488 = vmul.f32 %v487, %v487
        %v489 = vsel %vm481, %v488, 0.0
        %490 = vadd.xlane.f32.xlu0 %v489
        %v491 = vpop.xlane.xlu0 %490
        %v492 = vmul.f32 %v491, %v485
        %v493 = vadd.f32 %v492, 1e-05
        %v494 = vrsqrt.pop %v493
        %v495 = vmul.f32 %v487, %v494
        %v496 = vmax.f32 %v495, 0.0
        %v497 = vld [vmem:[%s5] sm:$0xff]
        %v498 = vld [vmem:[%s5 + $0x8] sm:$0xff]
        %v499 = vld [vmem:[%s5 + $0x10] sm:$0xff]
        %v500 = vld [vmem:[%s5 + $0x18] sm:$0xff]
        %v501 = vld [vmem:[%s5 + $0x20] sm:$0xff]
        %v502 = vld [vmem:[%s5 + $0x28] sm:$0xff]
        %v503 = vld [vmem:[%s5 + $0x30] sm:$0xff]
        %v504 = vld [vmem:[%s5 + $0x38] sm:$0xff]
        %v505 = vld [vmem:[%s6] sm:$0x1]
        %v507 = vlaneseq
        %v508 = vshrl.u32 %v507, 7
        %v509 = vsub.s32 0, %v508
        %v510 = vrot.slane %v505, %v509
        %v513 = vsel %vm481, %v496, 0
        %515 = vmatprep.subr.mxu0 0.0
        %516 = vmatpush1.msra.mxu0 0.0
        %517 = vmatprep.subr.mxu0 0.0
        %518 = vmatpush1.msra.mxu0 0.0
        %519 = vmatprep.subr.mxu0 0.0
        %520 = vmatpush1.msra.mxu0 0.0
        %521 = vmatprep.subr.mxu0 0.0
        %522 = vmatpush1.msra.mxu0 0.0
        %523 = vmatprep.subr.mxu0 0.0
        %524 = vmatpush1.msra.mxu0 0.0
        %525 = vmatprep.subr.mxu0 0.0
        %526 = vmatpush1.msra.mxu0 0.0
        %527 = vmatprep.subr.mxu0 0.0
        %528 = vmatpush1.msra.mxu0 0.0
        %529 = vmatprep.subr.mxu0 0.0
        %530 = vmatpush1.msra.mxu0 0.0
        %531 = vmatprep.subr.mxu0 0.0
        %532 = vmatpush1.msra.mxu0 %v504
        %533 = vmatprep.subr.mxu0 0.0
        %534 = vmatpush1.msra.mxu0 %v503
        %535 = vmatprep.subr.mxu0 0.0
        %536 = vmatpush1.msra.mxu0 %v502
        %537 = vmatprep.subr.mxu0 0.0
        %538 = vmatpush1.msra.mxu0 %v501
        %539 = vmatprep.subr.mxu0 0.0
        %540 = vmatpush1.msra.mxu0 %v500
        %541 = vmatprep.subr.mxu0 0.0
        %542 = vmatpush1.msra.mxu0 %v499
        %543 = vmatprep.subr.mxu0 0.0
        %544 = vmatpush1.msra.mxu0 %v498
        %545 = vmatprep.subr.mxu0 0.0
        %546 = vmatpush1.msra.mxu0 %v497
        %547 = vmatprep.subr.mxu0 0.0
        %548 = vmatpush2.msra.mxu0 0.0
        %549 = vmatprep.subr.mxu0 0.0
        %550 = vmatpush2.msra.mxu0 0.0
        %551 = vmatprep.subr.mxu0 0.0
        %552 = vmatpush2.msra.mxu0 0.0
        %553 = vmatprep.subr.mxu0 0.0
        %554 = vmatpush2.msra.mxu0 0.0
        %555 = vmatprep.subr.mxu0 0.0
        %556 = vmatpush2.msra.mxu0 0.0
        %557 = vmatprep.subr.mxu0 0.0
        %558 = vmatpush2.msra.mxu0 0.0
        %559 = vmatprep.subr.mxu0 0.0
        %560 = vmatpush2.msra.mxu0 0.0
        %561 = vmatprep.subr.mxu0 0.0
        %562 = vmatpush2.msra.mxu0 0.0
        %563 = vmatprep.subr.mxu0 0.0
        %564 = vmatpush2.msra.mxu0 0.0
        %565 = vmatprep.subr.mxu0 0.0
        %566 = vmatpush2.msra.mxu0 0.0
        %567 = vmatprep.subr.mxu0 0.0
        %568 = vmatpush2.msra.mxu0 0.0
        %569 = vmatprep.subr.mxu0 0.0
        %570 = vmatpush2.msra.mxu0 0.0
        %571 = vmatprep.subr.mxu0 0.0
        %572 = vmatpush2.msra.mxu0 0.0
        %573 = vmatprep.subr.mxu0 0.0
        %574 = vmatpush2.msra.mxu0 0.0
        %575 = vmatprep.subr.mxu0 0.0
        %576 = vmatpush2.msra.mxu0 0.0
        %577 = vmatprep.subr.mxu0 0.0
        %578 = vmatpush2.msra.mxu0 0.0
        %579 = vmatprep.mubr.f32.mxu0 0.0
        %580 = vmatmul.mubr.f32.gmra.mxu0 %v513
        %v581 = vpop.f32.mrf.mxu0
        %v582 = vadd.f32 %v510, %v581
        %v583 = vpop.f32.mrf.mxu0
        %584 = vdwg.mxu0
        %586 = vrot.lane.b32.xlu0 %v582, 64
        %v587 = vpop.permute.xlu0 %586
        %v589 = vsel %vm481, %v495, %v587
        %590 = vst [vmem:[%s269] sm:$0xff] %v589
        %s591 = sand.u32 %s181, 1
        %s592 = scalar_lea.sflag [#allocation3], %s591
        %s593 = sand.u32 %s181, 1
        %s594 = smul.addr %s593, 8
        %s595 = scalar_lea.vmem [#allocation2], %s594
        // Predicated region
        $region49: #{tpu_custom_call.1} parent=47 // pred_check
          %p596 = pneg %p191
        $region50: #{tpu_custom_call.1} parent=47 // pred_check_branch
          %598 = sbr.rel (%p596) target = $region52
        $region51: #{tpu_custom_call.1} parent=47 // pred_region
          %s600 = ssub.s32 128, 128
          %601 = vsyncadd %s592, %s600
          %s602 = smul.addr %s21, 128
          %s603 = scalar_lea.hbm %s7, %s602
          %s605 = sshll.u32 %s595, 4
          %s606 = int_to_ptr.vmem [resolvable:$true] %s605
          %608 = dma.vmem_to_hbm [thread:$0]  %s606, 128, %s603, %s592
        $region52: #{tpu_custom_call.1} parent=47 // pred_fallthru
          _
      $region48: #{tpu_custom_call.1} parent=5 // pred_fallthru
        _
      %p609 = scmp.le.s32.totalorder 2, %s16
      // Predicated region
      $region53: #{tpu_custom_call.1} parent=5 // pred_check
        %p610 = pneg %p609
      $region54: #{tpu_custom_call.1} parent=5 // pred_check_branch
        %612 = sbr.rel (%p610) target = $region56
      $region55: #{tpu_custom_call.1} parent=5 // pred_region
        %s613 = ssub.s32 %s16, 2
        // Predicated region
        $region57: #{tpu_custom_call.1} parent=55 // pred_check
          %p614 = pneg %p197
        $region58: #{tpu_custom_call.1} parent=55 // pred_check_branch
          %616 = sbr.rel (%p614) target = $region60
        $region59: #{tpu_custom_call.1} parent=55 // pred_region
          %s617 = sand.u32 %s182, 1
          %s618 = scalar_lea.sflag [#allocation3], %s617
          %s619 = sand.u32 %s182, 1
          %s620 = smul.addr %s619, 8
          %s621 = scalar_lea.vmem [#allocation2], %s620
          %622 = dma.done %s618, 128
        $region60: #{tpu_custom_call.1} parent=55 // pred_fallthru
          _
      $region56: #{tpu_custom_call.1} parent=5 // pred_fallthru
        _
    $region6: #{tpu_custom_call.1} parent=1 // loop_footer
      %s20 = sadd.s32 1, %s16
    $region7: #{tpu_custom_call.1} parent=1 // loop_footer_branch
      %15 = sbr.rel target = $region3
    $region8: #{tpu_custom_call.1} parent=1 // loop_exit
      _
    %623 = vsyncpa [#allocation3], 1
    %s624 = scalar_lea.sflag [#allocation3], 1
    %625 = vsyncpa %s624, 1

</llo_original>
